<compile_context>
chip_gen: v6e
topology: v6e:2x2x1
jax: 0.10.0
libtpu: 0.0.40
codegen_flags: <defaults>
</compile_context>

<pallas_src>
import functools

import jax
import jax.numpy as jnp
from jax import lax
from jax.experimental import pallas as pl
from jax.experimental.pallas import tpu as pltpu

# --- small, config-consistent shapes (intermediate = 4 * hidden, like BERT) ---
BATCH = 2
SEQ = 8
HIDDEN = 32
INTERMEDIATE = 4 * HIDDEN          # 128
LN_EPS = 1e-12


def _bert_output_kernel(h_ref, w_ref, b_ref, res_ref, gamma_ref, beta_ref, out_ref):
    # h_ref:     (B*S, I)  intermediate activations
    # w_ref:     (I, H)    dense weight, pre-transposed
    # b_ref:     (1, H)    dense bias
    # res_ref:   (B*S, H)  residual input tensor
    # gamma/beta:(1, H)    LayerNorm affine params
    h = h_ref[...]
    w = w_ref[...]

    # Dense projection on the MXU (single push), bias + residual on the VPU.
    x = jnp.dot(h, w, preferred_element_type=jnp.float32)
    x = x + b_ref[...] + res_ref[...]                          # (B*S, H)

    # LayerNorm over the hidden (lane) dimension.
    inv_h = jnp.float32(1.0 / HIDDEN)
    mean = jnp.sum(x, axis=-1, keepdims=True) * inv_h          # (B*S, 1)
    xc = x - mean
    var = jnp.sum(xc * xc, axis=-1, keepdims=True) * inv_h     # (B*S, 1)
    inv_std = lax.rsqrt(var + LN_EPS)                          # EUP
    y = (xc * inv_std) * gamma_ref[...] + beta_ref[...]

    # One lane-dense full-width store.
    out_ref[...] = y.astype(out_ref.dtype)


@functools.partial(jax.jit, static_argnames=())
def my_bert_output(hidden_states, input_tensor, w_t, b, gamma, beta):
    """hidden_states: [B, S, I] f32; input_tensor: [B, S, H] f32.

    w_t: [I, H] (nn.Linear weight transposed), b/gamma/beta: [H].
    Returns LayerNorm(dropout(hidden_states @ w_t + b) + input_tensor), eval mode.
    """
    B, S, I = hidden_states.shape
    H = input_tensor.shape[-1]
    R = B * S

    h2 = hidden_states.reshape(R, I)
    res2 = input_tensor.reshape(R, H)
    b2 = b.reshape(1, H)
    g2 = gamma.reshape(1, H)
    be2 = beta.reshape(1, H)

    vmem = pl.BlockSpec(memory_space=pltpu.MemorySpace.VMEM)
    out = pl.pallas_call(
        _bert_output_kernel,
        out_shape=jax.ShapeDtypeStruct((R, H), jnp.float32),
        in_specs=[vmem] * 6,
        out_specs=vmem,
    )(h2, w_t, b2, res2, g2, be2)

    return out.reshape(B, S, H)


def _reference(hidden_states, input_tensor, w_t, b, gamma, beta):
    """Pure-JAX reference mirroring the PyTorch forward (eval mode)."""
    x = hidden_states @ w_t + b
    x = x + input_tensor
    mean = jnp.mean(x, axis=-1, keepdims=True)
    var = jnp.mean((x - mean) ** 2, axis=-1, keepdims=True)
    return (x - mean) / jnp.sqrt(var + LN_EPS) * gamma + beta


if __name__ == "__main__":
    key = jax.random.PRNGKey(0)
    k_h, k_res, k_w, k_b, k_g, k_be = jax.random.split(key, 6)

    # deterministic parameter init (initializer_range = 0.02, like BERT)
    init = lambda k, shape: 0.02 * jax.random.normal(k, shape, dtype=jnp.float32)
    # nn.Linear(I, H) weight is [H, I]; store transposed [I, H] for x @ W.
    w_t = init(k_w, (INTERMEDIATE, HIDDEN))
    b = init(k_b, (HIDDEN,))
    # LayerNorm params (perturbed from identity so the affine path is exercised).
    gamma = 1.0 + init(k_g, (HIDDEN,))
    beta = init(k_be, (HIDDEN,))

    hidden_states = jax.random.normal(k_h, (BATCH, SEQ, INTERMEDIATE), dtype=jnp.float32)
    input_tensor = jax.random.normal(k_res, (BATCH, SEQ, HIDDEN), dtype=jnp.float32)

    out = my_bert_output(hidden_states, input_tensor, w_t, b, gamma, beta)
    out = jax.block_until_ready(out)

    ref = _reference(hidden_states, input_tensor, w_t, b, gamma, beta)
    assert out.shape == (BATCH, SEQ, HIDDEN)
    assert jnp.allclose(out, ref, atol=1e-5, rtol=1e-5), "mismatch vs JAX reference"

    print("KERNEL_OK")
</pallas_src>

<mosaic_0001>
module attributes {stable_mosaic.version = 11 : i64} {
  func.func @_bert_output_kernel(%arg0: memref<16x128xf32, #tpu.memory_space<vmem>>, %arg1: memref<128x32xf32, #tpu.memory_space<vmem>>, %arg2: memref<1x32xf32, #tpu.memory_space<vmem>>, %arg3: memref<16x32xf32, #tpu.memory_space<vmem>>, %arg4: memref<1x32xf32, #tpu.memory_space<vmem>>, %arg5: memref<1x32xf32, #tpu.memory_space<vmem>>, %arg6: memref<16x32xf32, #tpu.memory_space<vmem>>) attributes {dimension_semantics = [], scalar_prefetch = 0 : i64, scratch_operands = 0 : i64, tpu.core_type = #tpu.core_type<tc>} {
    %c0 = arith.constant 0 : index
    %c0_0 = arith.constant 0 : index
    %0 = vector.load %arg0[%c0, %c0_0] : memref<16x128xf32, #tpu.memory_space<vmem>>, vector<16x128xf32>
    %c0_1 = arith.constant 0 : index
    %c0_2 = arith.constant 0 : index
    %1 = vector.load %arg1[%c0_1, %c0_2] : memref<128x32xf32, #tpu.memory_space<vmem>>, vector<128x32xf32>
    %cst = arith.constant dense<0.000000e+00> : vector<16x32xf32>
    %2 = tpu.matmul %0, %1, %cst {dimension_numbers = #tpu.dot_dimension_numbers<[1], [0], [0], [1], [0, 0, 1, 1], [], []>} : vector<16x128xf32>, vector<128x32xf32>, vector<16x32xf32> -> vector<16x32xf32>
    %c0_3 = arith.constant 0 : index
    %c0_4 = arith.constant 0 : index
    %3 = vector.load %arg2[%c0_3, %c0_4] : memref<1x32xf32, #tpu.memory_space<vmem>>, vector<1x32xf32>
    %4 = vector.broadcast %3 : vector<1x32xf32> to vector<16x32xf32>
    %5 = arith.addf %2, %4 : vector<16x32xf32>
    %c0_5 = arith.constant 0 : index
    %c0_6 = arith.constant 0 : index
    %6 = vector.load %arg3[%c0_5, %c0_6] : memref<16x32xf32, #tpu.memory_space<vmem>>, vector<16x32xf32>
    %7 = arith.addf %5, %6 : vector<16x32xf32>
    %cst_7 = arith.constant dense<0.000000e+00> : vector<16xf32>
    %8 = vector.multi_reduction <add>, %7, %cst_7 [1] : vector<16x32xf32> to vector<16xf32>
    %9 = vector.shape_cast %8 : vector<16xf32> to vector<16x1xf32>
    %cst_8 = arith.constant 3.125000e-02 : f32
    %10 = vector.broadcast %cst_8 : f32 to vector<16x1xf32>
    %11 = arith.mulf %9, %10 : vector<16x1xf32>
    %12 = vector.broadcast %11 : vector<16x1xf32> to vector<16x32xf32>
    %13 = arith.subf %7, %12 : vector<16x32xf32>
    %14 = arith.mulf %13, %13 : vector<16x32xf32>
    %cst_9 = arith.constant dense<0.000000e+00> : vector<16xf32>
    %15 = vector.multi_reduction <add>, %14, %cst_9 [1] : vector<16x32xf32> to vector<16xf32>
    %16 = vector.shape_cast %15 : vector<16xf32> to vector<16x1xf32>
    %cst_10 = arith.constant 3.125000e-02 : f32
    %17 = vector.broadcast %cst_10 : f32 to vector<16x1xf32>
    %18 = arith.mulf %16, %17 : vector<16x1xf32>
    %cst_11 = arith.constant 9.99999996E-13 : f32
    %19 = vector.broadcast %cst_11 : f32 to vector<16x1xf32>
    %20 = arith.addf %18, %19 : vector<16x1xf32>
    %21 = math.rsqrt %20 : vector<16x1xf32>
    %22 = vector.broadcast %21 : vector<16x1xf32> to vector<16x32xf32>
    %23 = arith.mulf %13, %22 : vector<16x32xf32>
    %c0_12 = arith.constant 0 : index
    %c0_13 = arith.constant 0 : index
    %24 = vector.load %arg4[%c0_12, %c0_13] : memref<1x32xf32, #tpu.memory_space<vmem>>, vector<1x32xf32>
    %25 = vector.broadcast %24 : vector<1x32xf32> to vector<16x32xf32>
    %26 = arith.mulf %23, %25 : vector<16x32xf32>
    %c0_14 = arith.constant 0 : index
    %c0_15 = arith.constant 0 : index
    %27 = vector.load %arg5[%c0_14, %c0_15] : memref<1x32xf32, #tpu.memory_space<vmem>>, vector<1x32xf32>
    %28 = vector.broadcast %27 : vector<1x32xf32> to vector<16x32xf32>
    %29 = arith.addf %26, %28 : vector<16x32xf32>
    %c0_16 = arith.constant 0 : index
    %c0_17 = arith.constant 0 : index
    %30 = vector.load %arg6[%c0_16, %c0_17] : memref<16x32xf32, #tpu.memory_space<vmem>>, vector<16x32xf32>
    tpu.vector_store %arg6[%c0_16, %c0_17], %29 {strides = array<i32>} : memref<16x32xf32, #tpu.memory_space<vmem>>, vector<16x32xf32>,
    return
  }
}

</mosaic_0001>

<llo_original>
// kernel: my_bert_output.1
$region0: #{my_bert_output.1}
  #allocation0 [shape = 'u32[]', space=smem, size = 0x4, offset = 0x4, fixed_abs, tag = 'smem constant byte address 0x4 - core index']
  #allocation1 [shape = 'u32[144,128]{1,0:T(1,128)}', space=vmem, size = 0x12000, scoped, tag = 'internal scratch']
  %s0 = inlined_call_operand.vmem [shape: f32[16,128], index: 0, kind: input, shape index: {}]
  %s1 = inlined_call_operand.vmem [shape: f32[128,32], index: 1, kind: input, shape index: {}]
  %s2 = inlined_call_operand.vmem [shape: f32[1,32], index: 2, kind: input, shape index: {}]
  %s3 = inlined_call_operand.vmem [shape: f32[16,32], index: 3, kind: input, shape index: {}]
  %s4 = inlined_call_operand.vmem [shape: f32[1,32], index: 4, kind: input, shape index: {}]
  %s5 = inlined_call_operand.vmem [shape: f32[1,32], index: 5, kind: input, shape index: {}]
  %s6 = inlined_call_operand.hbm [shape: f32[16,32], index: 6, kind: output, shape index: {}]
  %s7 = sld [smem:[#allocation0]]
  $region34: #{my_bert_output.1} parent=0
    _
  %s9 = ssub.s32 1, %s7
  %s10 = scalar_select 0, %s9, %s7
  $region1: #{my_bert_output.1} parent=0
    #allocation2 [shape = 'u8[8192]{0}', space=vmem, size = 0x2000, scoped, tag = 'output window, operand 0, single buffered']
    #allocation3 [shape = 's32[1]{0}', space=sflag, size = 0x4, scoped, tag = 'scoped memory for my_bert_output.1']
    %11 = vsyncpa [#allocation3], 0
    // Predicated region
    $region2: #{my_bert_output.1} parent=1 // pred_check
      _
    $region3: #{my_bert_output.1} parent=1 // pred_check_branch
      %13 = sbr.rel (0) target = $region5
    $region4: #{my_bert_output.1} parent=1 // pred_region
      _
    $region5: #{my_bert_output.1} parent=1 // pred_fallthru
      _
    // Predicated region
    $region6: #{my_bert_output.1} parent=1 // pred_check
      _
    $region7: #{my_bert_output.1} parent=1 // pred_check_branch
      %15 = sbr.rel (0) target = $region9
    $region8: #{my_bert_output.1} parent=1 // pred_region
      _
    $region9: #{my_bert_output.1} parent=1 // pred_fallthru
      _
    // Predicated region
    $region10: #{my_bert_output.1} parent=1 // pred_check
      _
    $region11: #{my_bert_output.1} parent=1 // pred_check_branch
      %17 = sbr.rel (0) target = $region13
    $region12: #{my_bert_output.1} parent=1 // pred_region
      _
    $region13: #{my_bert_output.1} parent=1 // pred_fallthru
      _
    // Predicated region
    $region14: #{my_bert_output.1} parent=1 // pred_check
      _
    $region15: #{my_bert_output.1} parent=1 // pred_check_branch
      %19 = sbr.rel (0) target = $region17
    $region16: #{my_bert_output.1} parent=1 // pred_region
      _
    $region17: #{my_bert_output.1} parent=1 // pred_fallthru
      _
    // Predicated region
    $region18: #{my_bert_output.1} parent=1 // pred_check
      _
    $region19: #{my_bert_output.1} parent=1 // pred_check_branch
      %21 = sbr.rel (0) target = $region21
    $region20: #{my_bert_output.1} parent=1 // pred_region
      _
    $region21: #{my_bert_output.1} parent=1 // pred_fallthru
      _
    // Predicated region
    $region22: #{my_bert_output.1} parent=1 // pred_check
      _
    $region23: #{my_bert_output.1} parent=1 // pred_check_branch
      %23 = sbr.rel (0) target = $region25
    $region24: #{my_bert_output.1} parent=1 // pred_region
      _
    $region25: #{my_bert_output.1} parent=1 // pred_fallthru
      _
    %v24 = vld [vmem:[%s0] sm:$0xff]
    %v25 = vld [vmem:[%s0 + $0x8] sm:$0xff]
    %v26 = vld [vmem:[%s1] sm:$0xff]
    %v27 = vld [vmem:[%s1 + $0x8] sm:$0xff]
    %v28 = vld [vmem:[%s1 + $0x10] sm:$0xff]
    %v29 = vld [vmem:[%s1 + $0x18] sm:$0xff]
    %v30 = vld [vmem:[%s1 + $0x20] sm:$0xff]
    %v31 = vld [vmem:[%s1 + $0x28] sm:$0xff]
    %v32 = vld [vmem:[%s1 + $0x30] sm:$0xff]
    %v33 = vld [vmem:[%s1 + $0x38] sm:$0xff]
    %v34 = vld [vmem:[%s1 + $0x40] sm:$0xff]
    %v35 = vld [vmem:[%s1 + $0x48] sm:$0xff]
    %v36 = vld [vmem:[%s1 + $0x50] sm:$0xff]
    %v37 = vld [vmem:[%s1 + $0x58] sm:$0xff]
    %v38 = vld [vmem:[%s1 + $0x60] sm:$0xff]
    %v39 = vld [vmem:[%s1 + $0x68] sm:$0xff]
    %v40 = vld [vmem:[%s1 + $0x70] sm:$0xff]
    %v41 = vld [vmem:[%s1 + $0x78] sm:$0xff]
    %v42 = vld [vmem:[%s2] sm:$0x1]
    %v44 = vlaneseq
    %v45 = vshrl.u32 %v44, 7
    %v46 = vsub.s32 0, %v45
    %v47 = vrot.slane %v42, %v46
    %49 = vmatprep.subr.mxu0 0.0
    %50 = vmatpush1.msra.mxu0 %v41
    %51 = vmatprep.subr.mxu0 0.0
    %52 = vmatpush1.msra.mxu0 %v40
    %53 = vmatprep.subr.mxu0 0.0
    %54 = vmatpush1.msra.mxu0 %v39
    %55 = vmatprep.subr.mxu0 0.0
    %56 = vmatpush1.msra.mxu0 %v38
    %57 = vmatprep.subr.mxu0 0.0
    %58 = vmatpush1.msra.mxu0 %v37
    %59 = vmatprep.subr.mxu0 0.0
    %60 = vmatpush1.msra.mxu0 %v36
    %61 = vmatprep.subr.mxu0 0.0
    %62 = vmatpush1.msra.mxu0 %v35
    %63 = vmatprep.subr.mxu0 0.0
    %64 = vmatpush1.msra.mxu0 %v34
    %65 = vmatprep.subr.mxu0 0.0
    %66 = vmatpush1.msra.mxu0 %v33
    %67 = vmatprep.subr.mxu0 0.0
    %68 = vmatpush1.msra.mxu0 %v32
    %69 = vmatprep.subr.mxu0 0.0
    %70 = vmatpush1.msra.mxu0 %v31
    %71 = vmatprep.subr.mxu0 0.0
    %72 = vmatpush1.msra.mxu0 %v30
    %73 = vmatprep.subr.mxu0 0.0
    %74 = vmatpush1.msra.mxu0 %v29
    %75 = vmatprep.subr.mxu0 0.0
    %76 = vmatpush1.msra.mxu0 %v28
    %77 = vmatprep.subr.mxu0 0.0
    %78 = vmatpush1.msra.mxu0 %v27
    %79 = vmatprep.subr.mxu0 0.0
    %80 = vmatpush1.msra.mxu0 %v26
    %81 = vmatprep.subr.mxu0 0.0
    %82 = vmatpush2.msra.mxu0 0.0
    %83 = vmatprep.subr.mxu0 0.0
    %84 = vmatpush2.msra.mxu0 0.0
    %85 = vmatprep.subr.mxu0 0.0
    %86 = vmatpush2.msra.mxu0 0.0
    %87 = vmatprep.subr.mxu0 0.0
    %88 = vmatpush2.msra.mxu0 0.0
    %89 = vmatprep.subr.mxu0 0.0
    %90 = vmatpush2.msra.mxu0 0.0
    %91 = vmatprep.subr.mxu0 0.0
    %92 = vmatpush2.msra.mxu0 0.0
    %93 = vmatprep.subr.mxu0 0.0
    %94 = vmatpush2.msra.mxu0 0.0
    %95 = vmatprep.subr.mxu0 0.0
    %96 = vmatpush2.msra.mxu0 0.0
    %97 = vmatprep.subr.mxu0 0.0
    %98 = vmatpush2.msra.mxu0 0.0
    %99 = vmatprep.subr.mxu0 0.0
    %100 = vmatpush2.msra.mxu0 0.0
    %101 = vmatprep.subr.mxu0 0.0
    %102 = vmatpush2.msra.mxu0 0.0
    %103 = vmatprep.subr.mxu0 0.0
    %104 = vmatpush2.msra.mxu0 0.0
    %105 = vmatprep.subr.mxu0 0.0
    %106 = vmatpush2.msra.mxu0 0.0
    %107 = vmatprep.subr.mxu0 0.0
    %108 = vmatpush2.msra.mxu0 0.0
    %109 = vmatprep.subr.mxu0 0.0
    %110 = vmatpush2.msra.mxu0 0.0
    %111 = vmatprep.subr.mxu0 0.0
    %112 = vmatpush2.msra.mxu0 0.0
    %113 = vmatprep.mubr.f32.mxu0 0.0
    %114 = vmatmul.mubr.f32.gmra.mxu0 %v24
    %v115 = vpop.f32.mrf.mxu0
    %v116 = vadd.f32 %v47, %v115
    %v117 = vpop.f32.mrf.mxu0
    %118 = vmatprep.mubr.f32.mxu0 0.0
    %119 = vmatmul.mubr.f32.gmra.mxu0 %v25
    %v120 = vpop.f32.mrf.mxu0
    %v121 = vadd.f32 %v47, %v120
    %v122 = vpop.f32.mrf.mxu0
    %123 = vdwg.mxu0
    %v124 = vld [vmem:[%s3] sm:$0xff]
    %v125 = vld [vmem:[%s3 + $0x8] sm:$0xff]
    %v126 = vadd.f32 %v116, %v124
    %v127 = vadd.f32 %v121, %v125
    %vm128 = vcmask 261120
    %v129 = vsel %vm128, %v126, 0.0
    %130 = vadd.xlane.f32.xlu0 %v129
    %v131 = vpop.xlane.xlu0 %130
    %v132 = vsel %vm128, %v127, 0.0
    %133 = vadd.xlane.f32.xlu0 %v132
    %v134 = vpop.xlane.xlu0 %133
    %v135 = vmul.f32 %v131, 0.03125
    %v136 = vmul.f32 %v134, 0.03125
    %v137 = vsub.f32 %v126, %v135
    %v138 = vsub.f32 %v127, %v136
    %v139 = vmul.f32 %v137, %v137
    %v140 = vmul.f32 %v138, %v138
    %v141 = vsel %vm128, %v139, 0.0
    %142 = vadd.xlane.f32.xlu0 %v141
    %v143 = vpop.xlane.xlu0 %142
    %v144 = vsel %vm128, %v140, 0.0
    %145 = vadd.xlane.f32.xlu0 %v144
    %v146 = vpop.xlane.xlu0 %145
    %v147 = vmul.f32 %v143, 0.03125
    %v148 = vmul.f32 %v146, 0.03125
    %v149 = vadd.f32 %v147, 1e-12
    %v150 = vadd.f32 %v148, 1e-12
    %v151 = vrsqrt.pop %v149
    %v152 = vrsqrt.pop %v150
    %v153 = vmul.f32 %v137, %v151
    %v154 = vmul.f32 %v138, %v152
    %v155 = vld [vmem:[%s4] sm:$0x1]
    %v157 = vlaneseq
    %v158 = vshrl.u32 %v157, 7
    %v159 = vsub.s32 0, %v158
    %v160 = vrot.slane %v155, %v159
    %v162 = vmul.f32 %v153, %v160
    %v163 = vmul.f32 %v154, %v160
    %v164 = vld [vmem:[%s5] sm:$0x1]
    %v166 = vlaneseq
    %v167 = vshrl.u32 %v166, 7
    %v168 = vsub.s32 0, %v167
    %v169 = vrot.slane %v164, %v168
    %v171 = vadd.f32 %v162, %v169
    %v172 = vadd.f32 %v163, %v169
    %173 = vst.msk [vmem:[#allocation2] sm:$0xff] %vm128, %v171
    %174 = vst.msk [vmem:[#allocation2 + $0x8] sm:$0xff] %vm128, %v172
    // Predicated region
    $region26: #{my_bert_output.1} parent=1 // pred_check
      _
    $region27: #{my_bert_output.1} parent=1 // pred_check_branch
      %176 = sbr.rel (0) target = $region29
    $region28: #{my_bert_output.1} parent=1 // pred_region
      %s178 = ssub.s32 256, 256
      %179 = vsyncadd [#allocation3], %s178
      %s180 = sshll.u32 [#allocation2], 4
      %s181 = int_to_ptr.vmem [resolvable:$true] %s180
      %186 = dma.vmem_to_hbm [thread:$0]  %s181, 256, %s6, [#allocation3], 128, 128, 8
    $region29: #{my_bert_output.1} parent=1 // pred_fallthru
      _
    // Predicated region
    $region30: #{my_bert_output.1} parent=1 // pred_check
      _
    $region31: #{my_bert_output.1} parent=1 // pred_check_branch
      %188 = sbr.rel (0) target = $region33
    $region32: #{my_bert_output.1} parent=1 // pred_region
      %189 = dma.done [#allocation3], 256
    $region33: #{my_bert_output.1} parent=1 // pred_fallthru
      _
    %190 = vsyncpa [#allocation3], 1

</llo_original>
